<compile_context>
chip_gen: v5e
topology: v5e:2x2
jax: 0.10.0
libtpu: 0.0.40
codegen_flags: <defaults>
</compile_context>

<pallas_src>
import functools

import jax
import jax.numpy as jnp
from jax.experimental import pallas as pl
from jax.experimental.pallas import tpu as pltpu


# ---------------------------------------------------------------------------
# Kernel
# ---------------------------------------------------------------------------
def _scm_kernel(comb_ref, w1_ref, b1_ref, w2_ref, b2_ref, w3_ref, b3_ref,
                nw2_ref, nb2_ref, mix_ref, out_ref, *, ah):
    """One batch tile.

    comb_ref: (TB, A*D_in)            out_ref: (TB, A*D_obs)
    w1_ref:   (A*D_in, 2*A*H)  fused [effect | noise] first layer
    w2_ref:   (A*H, A*H)   w3_ref: (A*H, A*D_obs)   nw2_ref: (A*H, A*D_obs)
    mix_ref:  (A*D_obs, A*D_obs) = kron(softmax(C)^T, I_Dobs)
    biases:   (1, N) rows, broadcast over the tile.
    """
    x = comb_ref[...]

    # Fused first layer (effect net + noise net) -> ReLU, then split.
    hh = jnp.dot(x, w1_ref[...], preferred_element_type=jnp.float32) + b1_ref[...]
    hh = jnp.maximum(hh, 0.0)
    h_eff = hh[:, :ah]
    h_noise = hh[:, ah:]

    # Effect net: Linear -> ReLU -> Linear (block-diagonal over agents).
    h2 = jnp.dot(h_eff, w2_ref[...], preferred_element_type=jnp.float32) + b2_ref[...]
    h2 = jnp.maximum(h2, 0.0)
    eff = jnp.dot(h2, w3_ref[...], preferred_element_type=jnp.float32) + b3_ref[...]

    # Noise net second layer.
    noise = jnp.dot(h_noise, nw2_ref[...], preferred_element_type=jnp.float32) + nb2_ref[...]

    # Causal mixing as one MXU matmul: structured = eff @ kron(cw^T, I), + noise.
    out = jnp.dot(eff, mix_ref[...], preferred_element_type=jnp.float32) + noise
    out_ref[...] = out.astype(out_ref.dtype)


# ---------------------------------------------------------------------------
# Wrapper: packing + pallas_call
# ---------------------------------------------------------------------------
def _round_up(x, m):
    return ((x + m - 1) // m) * m


def _pack_params(params, d_obs):
    """Stack per-agent weights block-diagonally (lane-dense layouts)."""
    w1 = params["w1"]                       # (A, D_in, H)
    A, d_in, H = w1.shape
    d_act = d_in - d_obs
    eye_a = jnp.eye(A, dtype=jnp.float32)

    def block_diag(w):                      # (A, i, o) -> (A*i, A*o)
        a, i, o = w.shape
        return jnp.einsum("aio,ab->aibo", w, eye_a).reshape(a * i, a * o)

    # Fused first layer: effect columns then noise columns; noise weights only
    # see the obs rows of `combined` (action rows zero-padded).
    nw1_pad = jnp.pad(params["nw1"], ((0, 0), (0, d_act), (0, 0)))
    w1_fused = jnp.concatenate([block_diag(w1), block_diag(nw1_pad)], axis=1)
    b1_fused = jnp.concatenate(
        [params["b1"].reshape(1, A * H), params["nb1"].reshape(1, A * H)], axis=1)

    w2_bd = block_diag(params["w2"])
    b2c = params["b2"].reshape(1, A * H)
    w3_bd = block_diag(params["w3"])
    b3c = params["b3"].reshape(1, A * d_obs)
    nw2_bd = block_diag(params["nw2"])
    nb2c = params["nb2"].reshape(1, A * d_obs)

    # Softmax hoisted out of the kernel; mixing expressed as a dense matmul.
    cw = jax.nn.softmax(params["causal_matrix"], axis=-1)          # (A, A)
    mix = jnp.kron(cw.T, jnp.eye(d_obs, dtype=jnp.float32))        # (A*D, A*D)

    return w1_fused, b1_fused, w2_bd, b2c, w3_bd, b3c, nw2_bd, nb2c, mix


def scm_forward(observations, actions, params, *, tb=None):
    """observations: (B, A, D_obs) f32; actions: (B, A) int32 or (B, A, D_act) f32."""
    B, A, D_obs = observations.shape
    D_in = params["w1"].shape[1]
    H = params["w1"].shape[2]
    D_act = D_in - D_obs

    # Glue: one-hot int actions (matches F.one_hot(...).float()). The one-hot
    # matmul is folded into the block-diagonal first layer (tiny K overhead).
    if actions.ndim == 2:
        actions = jax.nn.one_hot(actions, D_act, dtype=jnp.float32)
    comb = jnp.concatenate(
        [observations.astype(jnp.float32), actions.astype(jnp.float32)], axis=-1)
    comb_flat = comb.reshape(B, A * D_in)        # pure reshape — no HBM transpose

    w1_fused, b1_fused, w2_bd, b2c, w3_bd, b3c, nw2_bd, nb2c, mix = \
        _pack_params(params, D_obs)

    AH = A * H
    AD = A * D_obs
    AD_in = A * D_in

    # Batch tiling: multiple of 8 sublanes; tiny VMEM footprint at these dims.
    if tb is None:
        tb = min(512, _round_up(B, 8))
    B_pad = _round_up(B, tb)
    if B_pad != B:
        comb_flat = jnp.pad(comb_flat, ((0, B_pad - B), (0, 0)))

    full = lambda shape: pl.BlockSpec(shape, lambda i: (0, 0))  # resident weights

    out_flat = pl.pallas_call(
        functools.partial(_scm_kernel, ah=AH),
        out_shape=jax.ShapeDtypeStruct((B_pad, AD), jnp.float32),
        grid=(B_pad // tb,),
        in_specs=[
            pl.BlockSpec((tb, AD_in), lambda i: (i, 0)),   # activations: batch-tiled
            full(w1_fused.shape), full(b1_fused.shape),
            full(w2_bd.shape), full(b2c.shape),
            full(w3_bd.shape), full(b3c.shape),
            full(nw2_bd.shape), full(nb2c.shape),
            full(mix.shape),
        ],
        out_specs=pl.BlockSpec((tb, AD), lambda i: (i, 0)),
        compiler_params=pltpu.CompilerParams(
            dimension_semantics=("parallel",)),            # batch axis -> both TCs on v7x
    )(comb_flat, w1_fused, b1_fused, w2_bd, b2c, w3_bd, b3c, nw2_bd, nb2c, mix)

    return out_flat[:B].reshape(B, A, D_obs)


# ---------------------------------------------------------------------------
# Parameters (PyTorch-Linear-style uniform init) and pure-JAX reference
# ---------------------------------------------------------------------------
def init_params(key, obs_dim, action_dim, hidden_dim, num_agents, use_causal_prior=True):
    def linear(k, fan_in, fan_out):
        kw, kb = jax.random.split(k)
        bound = 1.0 / jnp.sqrt(fan_in)
        w = jax.random.uniform(kw, (fan_in, fan_out), jnp.float32, -bound, bound)
        b = jax.random.uniform(kb, (1, fan_out), jnp.float32, -bound, bound)
        return w, b

    d_in = obs_dim + action_dim
    keys = jax.random.split(key, num_agents * 5)
    w1, b1, w2, b2, w3, b3, nw1, nb1, nw2, nb2 = ([] for _ in range(10))
    for i in range(num_agents):
        k0, k1, k2, k3, k4 = keys[i * 5: (i + 1) * 5]
        w, b = linear(k0, d_in, hidden_dim);       w1.append(w); b1.append(b)
        w, b = linear(k1, hidden_dim, hidden_dim); w2.append(w); b2.append(b)
        w, b = linear(k2, hidden_dim, obs_dim);    w3.append(w); b3.append(b)
        w, b = linear(k3, obs_dim, hidden_dim);    nw1.append(w); nb1.append(b)
        w, b = linear(k4, hidden_dim, obs_dim);    nw2.append(w); nb2.append(b)

    if use_causal_prior:
        cm = jnp.eye(num_agents, dtype=jnp.float32)
    else:
        cm = jax.random.normal(key, (num_agents, num_agents), jnp.float32)

    stack = lambda lst: jnp.stack(lst, axis=0)
    return {
        "causal_matrix": cm,
        "w1": stack(w1), "b1": stack(b1),
        "w2": stack(w2), "b2": stack(b2),
        "w3": stack(w3), "b3": stack(b3),
        "nw1": stack(nw1), "nb1": stack(nb1),
        "nw2": stack(nw2), "nb2": stack(nb2),
    }


def scm_reference(observations, actions, params):
    """Pure-JAX reference mirroring the PyTorch forward (for correctness check)."""
    B, A, D_obs = observations.shape
    action_dim = params["w1"].shape[1] - D_obs
    if actions.ndim == 2:
        actions = jax.nn.one_hot(actions, action_dim, dtype=jnp.float32)
    cw = jax.nn.softmax(params["causal_matrix"], axis=-1)
    combined = jnp.concatenate([observations, actions], axis=-1)
    effects, noises = [], []
    for i in range(A):
        x = combined[:, i]
        h = jax.nn.relu(x @ params["w1"][i] + params["b1"][i])
        h = jax.nn.relu(h @ params["w2"][i] + params["b2"][i])
        effects.append(h @ params["w3"][i] + params["b3"][i])
        o = observations[:, i]
        nh = jax.nn.relu(o @ params["nw1"][i] + params["nb1"][i])
        noises.append(nh @ params["nw2"][i] + params["nb2"][i])
    eff = jnp.stack(effects, axis=1)                    # (B, A, D_obs)
    structured = jnp.einsum("ji,bid->bjd", cw, eff)
    return structured + jnp.stack(noises, axis=1)


if __name__ == "__main__":
    obs_dim, action_dim, hidden_dim, num_agents, batch = 8, 4, 32, 2, 8

    key = jax.random.PRNGKey(0)
    k_obs, k_act, _ = jax.random.split(key, 3)
    observations = jax.random.normal(k_obs, (batch, num_agents, obs_dim), jnp.float32)
    actions = jax.random.randint(k_act, (batch, num_agents), 0, action_dim, jnp.int32)

    params = init_params(jax.random.PRNGKey(42), obs_dim, action_dim,
                         hidden_dim, num_agents, use_causal_prior=True)

    out = scm_forward(observations, actions, params)
    out = jax.block_until_ready(out)

    ref = scm_reference(observations, actions, params)
    assert out.shape == (batch, num_agents, obs_dim)
    assert jnp.allclose(out, ref, atol=2e-4, rtol=2e-4), "mismatch vs reference"

    print("KERNEL_OK")
</pallas_src>

<mosaic_0001>
module attributes {stable_mosaic.version = 11 : i64} {
  func.func @_scm_kernel(%arg0: i32, %arg1: memref<8x24xf32, #tpu.memory_space<vmem>>, %arg2: memref<24x128xf32, #tpu.memory_space<vmem>>, %arg3: memref<1x128xf32, #tpu.memory_space<vmem>>, %arg4: memref<64x64xf32, #tpu.memory_space<vmem>>, %arg5: memref<1x64xf32, #tpu.memory_space<vmem>>, %arg6: memref<64x16xf32, #tpu.memory_space<vmem>>, %arg7: memref<1x16xf32, #tpu.memory_space<vmem>>, %arg8: memref<64x16xf32, #tpu.memory_space<vmem>>, %arg9: memref<1x16xf32, #tpu.memory_space<vmem>>, %arg10: memref<16x16xf32, #tpu.memory_space<vmem>>, %arg11: memref<8x16xf32, #tpu.memory_space<vmem>>) attributes {dimension_semantics = [#tpu.dimension_semantics<parallel>], iteration_bounds = array<i64: 1>, scalar_prefetch = 0 : i64, scratch_operands = 0 : i64, tpu.core_type = #tpu.core_type<tc>, window_params = [{transform_indices = @transform_0, window_bounds = array<i64: 8, 24>}, {pipeline_mode = #tpu.pipeline_mode<synchronous>, transform_indices = @transform_1, window_bounds = array<i64: 24, 128>}, {pipeline_mode = #tpu.pipeline_mode<synchronous>, transform_indices = @transform_2, window_bounds = array<i64: 1, 128>}, {pipeline_mode = #tpu.pipeline_mode<synchronous>, transform_indices = @transform_3, window_bounds = array<i64: 64, 64>}, {pipeline_mode = #tpu.pipeline_mode<synchronous>, transform_indices = @transform_4, window_bounds = array<i64: 1, 64>}, {pipeline_mode = #tpu.pipeline_mode<synchronous>, transform_indices = @transform_5, window_bounds = array<i64: 64, 16>}, {pipeline_mode = #tpu.pipeline_mode<synchronous>, transform_indices = @transform_6, window_bounds = array<i64: 1, 16>}, {pipeline_mode = #tpu.pipeline_mode<synchronous>, transform_indices = @transform_7, window_bounds = array<i64: 64, 16>}, {pipeline_mode = #tpu.pipeline_mode<synchronous>, transform_indices = @transform_8, window_bounds = array<i64: 1, 16>}, {pipeline_mode = #tpu.pipeline_mode<synchronous>, transform_indices = @transform_9, window_bounds = array<i64: 16, 16>}, {transform_indices = @transform_10, window_bounds = array<i64: 8, 16>}]} {
    %c0 = arith.constant 0 : index
    %c0_0 = arith.constant 0 : index
    %0 = vector.load %arg1[%c0, %c0_0] : memref<8x24xf32, #tpu.memory_space<vmem>>, vector<8x24xf32>
    %c0_1 = arith.constant 0 : index
    %c0_2 = arith.constant 0 : index
    %1 = vector.load %arg2[%c0_1, %c0_2] : memref<24x128xf32, #tpu.memory_space<vmem>>, vector<24x128xf32>
    %cst = arith.constant dense<0.000000e+00> : vector<8x128xf32>
    %2 = tpu.matmul %0, %1, %cst {dimension_numbers = #tpu.dot_dimension_numbers<[1], [0], [0], [1], [0, 0, 1, 1], [], []>} : vector<8x24xf32>, vector<24x128xf32>, vector<8x128xf32> -> vector<8x128xf32>
    %c0_3 = arith.constant 0 : index
    %c0_4 = arith.constant 0 : index
    %3 = vector.load %arg3[%c0_3, %c0_4] : memref<1x128xf32, #tpu.memory_space<vmem>>, vector<1x128xf32>
    %4 = vector.broadcast %3 : vector<1x128xf32> to vector<8x128xf32>
    %5 = arith.addf %2, %4 : vector<8x128xf32>
    %cst_5 = arith.constant 0.000000e+00 : f32
    %6 = vector.broadcast %cst_5 : f32 to vector<8x128xf32>
    %7 = arith.maximumf %5, %6 : vector<8x128xf32>
    %8 = vector.extract_strided_slice %7 {offsets = [0, 0], sizes = [8, 64], strides = [1, 1]} : vector<8x128xf32> to vector<8x64xf32>
    %9 = vector.extract_strided_slice %7 {offsets = [0, 64], sizes = [8, 64], strides = [1, 1]} : vector<8x128xf32> to vector<8x64xf32>
    %c0_6 = arith.constant 0 : index
    %c0_7 = arith.constant 0 : index
    %10 = vector.load %arg4[%c0_6, %c0_7] : memref<64x64xf32, #tpu.memory_space<vmem>>, vector<64x64xf32>
    %cst_8 = arith.constant dense<0.000000e+00> : vector<8x64xf32>
    %11 = tpu.matmul %8, %10, %cst_8 {dimension_numbers = #tpu.dot_dimension_numbers<[1], [0], [0], [1], [0, 0, 1, 1], [], []>} : vector<8x64xf32>, vector<64x64xf32>, vector<8x64xf32> -> vector<8x64xf32>
    %c0_9 = arith.constant 0 : index
    %c0_10 = arith.constant 0 : index
    %12 = vector.load %arg5[%c0_9, %c0_10] : memref<1x64xf32, #tpu.memory_space<vmem>>, vector<1x64xf32>
    %13 = vector.broadcast %12 : vector<1x64xf32> to vector<8x64xf32>
    %14 = arith.addf %11, %13 : vector<8x64xf32>
    %cst_11 = arith.constant 0.000000e+00 : f32
    %15 = vector.broadcast %cst_11 : f32 to vector<8x64xf32>
    %16 = arith.maximumf %14, %15 : vector<8x64xf32>
    %c0_12 = arith.constant 0 : index
    %c0_13 = arith.constant 0 : index
    %17 = vector.load %arg6[%c0_12, %c0_13] : memref<64x16xf32, #tpu.memory_space<vmem>>, vector<64x16xf32>
    %cst_14 = arith.constant dense<0.000000e+00> : vector<8x16xf32>
    %18 = tpu.matmul %16, %17, %cst_14 {dimension_numbers = #tpu.dot_dimension_numbers<[1], [0], [0], [1], [0, 0, 1, 1], [], []>} : vector<8x64xf32>, vector<64x16xf32>, vector<8x16xf32> -> vector<8x16xf32>
    %c0_15 = arith.constant 0 : index
    %c0_16 = arith.constant 0 : index
    %19 = vector.load %arg7[%c0_15, %c0_16] : memref<1x16xf32, #tpu.memory_space<vmem>>, vector<1x16xf32>
    %20 = vector.broadcast %19 : vector<1x16xf32> to vector<8x16xf32>
    %21 = arith.addf %18, %20 : vector<8x16xf32>
    %c0_17 = arith.constant 0 : index
    %c0_18 = arith.constant 0 : index
    %22 = vector.load %arg8[%c0_17, %c0_18] : memref<64x16xf32, #tpu.memory_space<vmem>>, vector<64x16xf32>
    %cst_19 = arith.constant dense<0.000000e+00> : vector<8x16xf32>
    %23 = tpu.matmul %9, %22, %cst_19 {dimension_numbers = #tpu.dot_dimension_numbers<[1], [0], [0], [1], [0, 0, 1, 1], [], []>} : vector<8x64xf32>, vector<64x16xf32>, vector<8x16xf32> -> vector<8x16xf32>
    %c0_20 = arith.constant 0 : index
    %c0_21 = arith.constant 0 : index
    %24 = vector.load %arg9[%c0_20, %c0_21] : memref<1x16xf32, #tpu.memory_space<vmem>>, vector<1x16xf32>
    %25 = vector.broadcast %24 : vector<1x16xf32> to vector<8x16xf32>
    %26 = arith.addf %23, %25 : vector<8x16xf32>
    %c0_22 = arith.constant 0 : index
    %c0_23 = arith.constant 0 : index
    %27 = vector.load %arg10[%c0_22, %c0_23] : memref<16x16xf32, #tpu.memory_space<vmem>>, vector<16x16xf32>
    %cst_24 = arith.constant dense<0.000000e+00> : vector<8x16xf32>
    %28 = tpu.matmul %21, %27, %cst_24 {dimension_numbers = #tpu.dot_dimension_numbers<[1], [0], [0], [1], [0, 0, 1, 1], [], []>} : vector<8x16xf32>, vector<16x16xf32>, vector<8x16xf32> -> vector<8x16xf32>
    %29 = arith.addf %28, %26 : vector<8x16xf32>
    %c0_25 = arith.constant 0 : index
    %c0_26 = arith.constant 0 : index
    %30 = vector.load %arg11[%c0_25, %c0_26] : memref<8x16xf32, #tpu.memory_space<vmem>>, vector<8x16xf32>
    tpu.vector_store %arg11[%c0_25, %c0_26], %29 {strides = array<i32>} : memref<8x16xf32, #tpu.memory_space<vmem>>, vector<8x16xf32>,
    return
  }
  func.func @transform_0(%arg0: i32) -> (i32, i32) {
    %c0_i32 = arith.constant 0 : i32
    %c0_i32_0 = arith.constant 0 : i32
    return %arg0, %c0_i32 : i32, i32
  }
  func.func @transform_1(%arg0: i32) -> (i32, i32) {
    %c0_i32 = arith.constant 0 : i32
    %c0_i32_0 = arith.constant 0 : i32
    %c0_i32_1 = arith.constant 0 : i32
    return %c0_i32, %c0_i32_0 : i32, i32
  }
  func.func @transform_2(%arg0: i32) -> (i32, i32) {
    %c0_i32 = arith.constant 0 : i32
    %c0_i32_0 = arith.constant 0 : i32
    %c0_i32_1 = arith.constant 0 : i32
    return %c0_i32, %c0_i32_0 : i32, i32
  }
  func.func @transform_3(%arg0: i32) -> (i32, i32) {
    %c0_i32 = arith.constant 0 : i32
    %c0_i32_0 = arith.constant 0 : i32
    %c0_i32_1 = arith.constant 0 : i32
    return %c0_i32, %c0_i32_0 : i32, i32
  }
  func.func @transform_4(%arg0: i32) -> (i32, i32) {
    %c0_i32 = arith.constant 0 : i32
    %c0_i32_0 = arith.constant 0 : i32
    %c0_i32_1 = arith.constant 0 : i32
    return %c0_i32, %c0_i32_0 : i32, i32
  }
  func.func @transform_5(%arg0: i32) -> (i32, i32) {
    %c0_i32 = arith.constant 0 : i32
    %c0_i32_0 = arith.constant 0 : i32
    %c0_i32_1 = arith.constant 0 : i32
    return %c0_i32, %c0_i32_0 : i32, i32
  }
  func.func @transform_6(%arg0: i32) -> (i32, i32) {
    %c0_i32 = arith.constant 0 : i32
    %c0_i32_0 = arith.constant 0 : i32
    %c0_i32_1 = arith.constant 0 : i32
    return %c0_i32, %c0_i32_0 : i32, i32
  }
  func.func @transform_7(%arg0: i32) -> (i32, i32) {
    %c0_i32 = arith.constant 0 : i32
    %c0_i32_0 = arith.constant 0 : i32
    %c0_i32_1 = arith.constant 0 : i32
    return %c0_i32, %c0_i32_0 : i32, i32
  }
  func.func @transform_8(%arg0: i32) -> (i32, i32) {
    %c0_i32 = arith.constant 0 : i32
    %c0_i32_0 = arith.constant 0 : i32
    %c0_i32_1 = arith.constant 0 : i32
    return %c0_i32, %c0_i32_0 : i32, i32
  }
  func.func @transform_9(%arg0: i32) -> (i32, i32) {
    %c0_i32 = arith.constant 0 : i32
    %c0_i32_0 = arith.constant 0 : i32
    %c0_i32_1 = arith.constant 0 : i32
    return %c0_i32, %c0_i32_0 : i32, i32
  }
  func.func @transform_10(%arg0: i32) -> (i32, i32) {
    %c0_i32 = arith.constant 0 : i32
    %c0_i32_0 = arith.constant 0 : i32
    return %arg0, %c0_i32 : i32, i32
  }
}

</mosaic_0001>

<llo_original>
// kernel: tpu_custom_call.1
$region0: #{tpu_custom_call.1}
  #allocation0 [shape = 'u32[]', space=smem, size = 0x4, offset = 0x4, fixed_abs, tag = 'smem constant byte address 0x4 - core index']
  #allocation1 [shape = 'u32[72,128]{1,0:T(1,128)}', space=vmem, size = 0x9000, scoped, tag = 'internal scratch']
  %s0 = inlined_call_operand.vmem [shape: f32[8,24], index: 0, kind: input, shape index: {}]
  %s1 = inlined_call_operand.vmem [shape: f32[24,128], index: 1, kind: input, shape index: {}]
  %s2 = inlined_call_operand.vmem [shape: f32[1,128], index: 2, kind: input, shape index: {}]
  %s3 = inlined_call_operand.vmem [shape: f32[64,64], index: 3, kind: input, shape index: {}]
  %s4 = inlined_call_operand.vmem [shape: f32[1,64], index: 4, kind: input, shape index: {}]
  %s5 = inlined_call_operand.vmem [shape: f32[64,16], index: 5, kind: input, shape index: {}]
  %s6 = inlined_call_operand.vmem [shape: f32[1,16], index: 6, kind: input, shape index: {}]
  %s7 = inlined_call_operand.vmem [shape: f32[64,16], index: 7, kind: input, shape index: {}]
  %s8 = inlined_call_operand.vmem [shape: f32[1,16], index: 8, kind: input, shape index: {}]
  %s9 = inlined_call_operand.vmem [shape: f32[16,16], index: 9, kind: input, shape index: {}]
  %s10 = inlined_call_operand.hbm [shape: f32[8,16], index: 10, kind: output, shape index: {}]
  %s11 = sld [smem:[#allocation0]]
  $region50: #{tpu_custom_call.1} parent=0
    _
  %s13 = ssub.s32 1, %s11
  %s14 = scalar_select 0, %s13, %s11
  $region1: #{tpu_custom_call.1} parent=0
    #allocation2 [shape = 'u8[4096]{0}', space=vmem, size = 0x1000, scoped, tag = 'output window, operand 0, single buffered']
    #allocation3 [shape = 's32[1]{0}', space=sflag, size = 0x4, scoped, tag = 'scoped memory for tpu_custom_call.1']
    %15 = vsyncpa [#allocation3], 0
    // Predicated region
    $region2: #{tpu_custom_call.1} parent=1 // pred_check
      _
    $region3: #{tpu_custom_call.1} parent=1 // pred_check_branch
      %17 = sbr.rel (0) target = $region5
    $region4: #{tpu_custom_call.1} parent=1 // pred_region
      _
    $region5: #{tpu_custom_call.1} parent=1 // pred_fallthru
      _
    // Predicated region
    $region6: #{tpu_custom_call.1} parent=1 // pred_check
      _
    $region7: #{tpu_custom_call.1} parent=1 // pred_check_branch
      %19 = sbr.rel (0) target = $region9
    $region8: #{tpu_custom_call.1} parent=1 // pred_region
      _
    $region9: #{tpu_custom_call.1} parent=1 // pred_fallthru
      _
    // Predicated region
    $region10: #{tpu_custom_call.1} parent=1 // pred_check
      _
    $region11: #{tpu_custom_call.1} parent=1 // pred_check_branch
      %21 = sbr.rel (0) target = $region13
    $region12: #{tpu_custom_call.1} parent=1 // pred_region
      _
    $region13: #{tpu_custom_call.1} parent=1 // pred_fallthru
      _
    // Predicated region
    $region14: #{tpu_custom_call.1} parent=1 // pred_check
      _
    $region15: #{tpu_custom_call.1} parent=1 // pred_check_branch
      %23 = sbr.rel (0) target = $region17
    $region16: #{tpu_custom_call.1} parent=1 // pred_region
      _
    $region17: #{tpu_custom_call.1} parent=1 // pred_fallthru
      _
    // Predicated region
    $region18: #{tpu_custom_call.1} parent=1 // pred_check
      _
    $region19: #{tpu_custom_call.1} parent=1 // pred_check_branch
      %25 = sbr.rel (0) target = $region21
    $region20: #{tpu_custom_call.1} parent=1 // pred_region
      _
    $region21: #{tpu_custom_call.1} parent=1 // pred_fallthru
      _
    // Predicated region
    $region22: #{tpu_custom_call.1} parent=1 // pred_check
      _
    $region23: #{tpu_custom_call.1} parent=1 // pred_check_branch
      %27 = sbr.rel (0) target = $region25
    $region24: #{tpu_custom_call.1} parent=1 // pred_region
      _
    $region25: #{tpu_custom_call.1} parent=1 // pred_fallthru
      _
    // Predicated region
    $region26: #{tpu_custom_call.1} parent=1 // pred_check
      _
    $region27: #{tpu_custom_call.1} parent=1 // pred_check_branch
      %29 = sbr.rel (0) target = $region29
    $region28: #{tpu_custom_call.1} parent=1 // pred_region
      _
    $region29: #{tpu_custom_call.1} parent=1 // pred_fallthru
      _
    // Predicated region
    $region30: #{tpu_custom_call.1} parent=1 // pred_check
      _
    $region31: #{tpu_custom_call.1} parent=1 // pred_check_branch
      %31 = sbr.rel (0) target = $region33
    $region32: #{tpu_custom_call.1} parent=1 // pred_region
      _
    $region33: #{tpu_custom_call.1} parent=1 // pred_fallthru
      _
    // Predicated region
    $region34: #{tpu_custom_call.1} parent=1 // pred_check
      _
    $region35: #{tpu_custom_call.1} parent=1 // pred_check_branch
      %33 = sbr.rel (0) target = $region37
    $region36: #{tpu_custom_call.1} parent=1 // pred_region
      _
    $region37: #{tpu_custom_call.1} parent=1 // pred_fallthru
      _
    // Predicated region
    $region38: #{tpu_custom_call.1} parent=1 // pred_check
      _
    $region39: #{tpu_custom_call.1} parent=1 // pred_check_branch
      %35 = sbr.rel (0) target = $region41
    $region40: #{tpu_custom_call.1} parent=1 // pred_region
      _
    $region41: #{tpu_custom_call.1} parent=1 // pred_fallthru
      _
    %v36 = vld [vmem:[%s0] sm:$0xff]
    %v37 = vld [vmem:[%s1] sm:$0xff]
    %v38 = vld [vmem:[%s1 + $0x8] sm:$0xff]
    %v39 = vld [vmem:[%s1 + $0x10] sm:$0xff]
    %v40 = vld [vmem:[%s2] sm:$0x1]
    %v42 = vperm.slane %v40, 0
    %vm44 = vcmask 195584
    %v46 = vsel %vm44, %v36, 0
    %48 = vmatpush.msra.mxu0 0.0
    %49 = vmatpush.msra.mxu0 0.0
    %50 = vmatpush.msra.mxu0 0.0
    %51 = vmatpush.msra.mxu0 0.0
    %52 = vmatpush.msra.mxu0 0.0
    %53 = vmatpush.msra.mxu0 0.0
    %54 = vmatpush.msra.mxu0 0.0
    %55 = vmatpush.msra.mxu0 0.0
    %56 = vmatpush.msra.mxu0 0.0
    %57 = vmatpush.msra.mxu0 0.0
    %58 = vmatpush.msra.mxu0 0.0
    %59 = vmatpush.msra.mxu0 0.0
    %60 = vmatpush.msra.mxu0 0.0
    %61 = vmatpush.msra.mxu0 %v39
    %62 = vmatpush.msra.mxu0 %v38
    %63 = vmatpush.msra.mxu0 %v37
    %64 = vmatmul.f32.gmra.mxu0 %v46
    %v65 = vpop.f32.mrf.mxu0
    %v66 = vadd.f32 %v42, %v65
    %67 = vdwg.mxu0
    %v68 = vmax.f32 %v66, 0.0
    %v69 = vld [vmem:[%s3] sm:$0xff]
    %v70 = vld [vmem:[%s3 + $0x8] sm:$0xff]
    %v71 = vld [vmem:[%s3 + $0x10] sm:$0xff]
    %v72 = vld [vmem:[%s3 + $0x18] sm:$0xff]
    %v73 = vld [vmem:[%s3 + $0x20] sm:$0xff]
    %v74 = vld [vmem:[%s3 + $0x28] sm:$0xff]
    %v75 = vld [vmem:[%s3 + $0x30] sm:$0xff]
    %v76 = vld [vmem:[%s3 + $0x38] sm:$0xff]
    %v77 = vld [vmem:[%s4] sm:$0x1]
    %v79 = vperm.slane %v77, 0
    %vm81 = vcmask 523264
    %v83 = vsel %vm81, %v68, 0
    %85 = vmatpush.msra.mxu0 0.0
    %86 = vmatpush.msra.mxu0 0.0
    %87 = vmatpush.msra.mxu0 0.0
    %88 = vmatpush.msra.mxu0 0.0
    %89 = vmatpush.msra.mxu0 0.0
    %90 = vmatpush.msra.mxu0 0.0
    %91 = vmatpush.msra.mxu0 0.0
    %92 = vmatpush.msra.mxu0 0.0
    %93 = vmatpush.msra.mxu0 %v76
    %94 = vmatpush.msra.mxu0 %v75
    %95 = vmatpush.msra.mxu0 %v74
    %96 = vmatpush.msra.mxu0 %v73
    %97 = vmatpush.msra.mxu0 %v72
    %98 = vmatpush.msra.mxu0 %v71
    %99 = vmatpush.msra.mxu0 %v70
    %100 = vmatpush.msra.mxu0 %v69
    %101 = vmatmul.f32.gmra.mxu0 %v83
    %v102 = vpop.f32.mrf.mxu0
    %v103 = vadd.f32 %v79, %v102
    %104 = vdwg.mxu0
    %v105 = vmax.f32 %v103, 0.0
    %v106 = vld [vmem:[%s5] sm:$0xff]
    %v107 = vld [vmem:[%s5 + $0x8] sm:$0xff]
    %v108 = vld [vmem:[%s5 + $0x10] sm:$0xff]
    %v109 = vld [vmem:[%s5 + $0x18] sm:$0xff]
    %v110 = vld [vmem:[%s5 + $0x20] sm:$0xff]
    %v111 = vld [vmem:[%s5 + $0x28] sm:$0xff]
    %v112 = vld [vmem:[%s5 + $0x30] sm:$0xff]
    %v113 = vld [vmem:[%s5 + $0x38] sm:$0xff]
    %v114 = vld [vmem:[%s6] sm:$0x1]
    %v116 = vperm.slane %v114, 0
    %v119 = vsel %vm81, %v105, 0
    %121 = vmatpush.msra.mxu0 0.0
    %122 = vmatpush.msra.mxu0 0.0
    %123 = vmatpush.msra.mxu0 0.0
    %124 = vmatpush.msra.mxu0 0.0
    %125 = vmatpush.msra.mxu0 0.0
    %126 = vmatpush.msra.mxu0 0.0
    %127 = vmatpush.msra.mxu0 0.0
    %128 = vmatpush.msra.mxu0 0.0
    %129 = vmatpush.msra.mxu0 %v113
    %130 = vmatpush.msra.mxu0 %v112
    %131 = vmatpush.msra.mxu0 %v111
    %132 = vmatpush.msra.mxu0 %v110
    %133 = vmatpush.msra.mxu0 %v109
    %134 = vmatpush.msra.mxu0 %v108
    %135 = vmatpush.msra.mxu0 %v107
    %136 = vmatpush.msra.mxu0 %v106
    %137 = vmatmul.f32.gmra.mxu0 %v119
    %v138 = vpop.f32.mrf.mxu0
    %v139 = vadd.f32 %v116, %v138
    %140 = vdwg.mxu0
    %v141 = vld [vmem:[%s7] sm:$0xff]
    %v142 = vld [vmem:[%s7 + $0x8] sm:$0xff]
    %v143 = vld [vmem:[%s7 + $0x10] sm:$0xff]
    %v144 = vld [vmem:[%s7 + $0x18] sm:$0xff]
    %v145 = vld [vmem:[%s7 + $0x20] sm:$0xff]
    %v146 = vld [vmem:[%s7 + $0x28] sm:$0xff]
    %v147 = vld [vmem:[%s7 + $0x30] sm:$0xff]
    %v148 = vld [vmem:[%s7 + $0x38] sm:$0xff]
    %v149 = vld [vmem:[%s8] sm:$0x1]
    %v151 = vperm.slane %v149, 0
    %153 = vrot.lane.b32.xlu0 %v68, 64
    %v154 = vpop.permute.xlu0 %153
    %v155 = vsel %vm81, %v154, 0
    %157 = vmatpush.msra.mxu0 0.0
    %158 = vmatpush.msra.mxu0 0.0
    %159 = vmatpush.msra.mxu0 0.0
    %160 = vmatpush.msra.mxu0 0.0
    %161 = vmatpush.msra.mxu0 0.0
    %162 = vmatpush.msra.mxu0 0.0
    %163 = vmatpush.msra.mxu0 0.0
    %164 = vmatpush.msra.mxu0 0.0
    %165 = vmatpush.msra.mxu0 %v148
    %166 = vmatpush.msra.mxu0 %v147
    %167 = vmatpush.msra.mxu0 %v146
    %168 = vmatpush.msra.mxu0 %v145
    %169 = vmatpush.msra.mxu0 %v144
    %170 = vmatpush.msra.mxu0 %v143
    %171 = vmatpush.msra.mxu0 %v142
    %172 = vmatpush.msra.mxu0 %v141
    %173 = vmatmul.f32.gmra.mxu0 %v155
    %v174 = vpop.f32.mrf.mxu0
    %v175 = vadd.f32 %v151, %v174
    %176 = vdwg.mxu0
    %v177 = vld [vmem:[%s9] sm:$0xff]
    %v178 = vld [vmem:[%s9 + $0x8] sm:$0xff]
    %vm179 = vcmask 130048
    %v181 = vsel %vm179, %v139, 0
    %183 = vmatpush.msra.mxu0 0.0
    %184 = vmatpush.msra.mxu0 0.0
    %185 = vmatpush.msra.mxu0 0.0
    %186 = vmatpush.msra.mxu0 0.0
    %187 = vmatpush.msra.mxu0 0.0
    %188 = vmatpush.msra.mxu0 0.0
    %189 = vmatpush.msra.mxu0 0.0
    %190 = vmatpush.msra.mxu0 0.0
    %191 = vmatpush.msra.mxu0 0.0
    %192 = vmatpush.msra.mxu0 0.0
    %193 = vmatpush.msra.mxu0 0.0
    %194 = vmatpush.msra.mxu0 0.0
    %195 = vmatpush.msra.mxu0 0.0
    %196 = vmatpush.msra.mxu0 0.0
    %197 = vmatpush.msra.mxu0 %v178
    %198 = vmatpush.msra.mxu0 %v177
    %199 = vmatmul.f32.gmra.mxu0 %v181
    %v200 = vpop.f32.mrf.mxu0
    %v201 = vadd.f32 %v175, %v200
    %202 = vdwg.mxu0
    %203 = vst.msk [vmem:[#allocation2] sm:$0xff] %vm179, %v201
    // Predicated region
    $region42: #{tpu_custom_call.1} parent=1 // pred_check
      _
    $region43: #{tpu_custom_call.1} parent=1 // pred_check_branch
      %205 = sbr.rel (0) target = $region45
    $region44: #{tpu_custom_call.1} parent=1 // pred_region
      %207 = vsyncadd [#allocation3], 0
      %s209 = sshll.u32 [#allocation2], 4
      %s210 = int_to_ptr.vmem [resolvable:$true] %s209
      %s211 = sshll.u32 %s10, 4
      %s212 = int_to_ptr.hbm [resolvable:$true] %s211
      %214 = dma.vmem_to_hbm [thread:$0]  %s210, 128, %s212, [#allocation3]
    $region45: #{tpu_custom_call.1} parent=1 // pred_fallthru
      _
    // Predicated region
    $region46: #{tpu_custom_call.1} parent=1 // pred_check
      _
    $region47: #{tpu_custom_call.1} parent=1 // pred_check_branch
      %216 = sbr.rel (0) target = $region49
    $region48: #{tpu_custom_call.1} parent=1 // pred_region
      %218 = dma.done [#allocation3], 128
    $region49: #{tpu_custom_call.1} parent=1 // pred_fallthru
      _
    %219 = vsyncpa [#allocation3], 1

</llo_original>
